<compile_context>
chip_gen: v5e
topology: v5e:2x2
jax: 0.10.0
libtpu: 0.0.40
codegen_flags: <defaults>
</compile_context>

<pallas_src>
import functools

import jax
import jax.numpy as jnp
from jax.experimental import pallas as pl
from jax.experimental.pallas import tpu as pltpu


# ------------------------------ small helpers -------------------------------

def _round_up(x, m):
    return (x + m - 1) // m * m


def _vmem_limit_bytes():
    """Per-generation VMEM budget (~96 MiB on 128-MiB parts, ~48 MiB on v7x)."""
    try:
        cap = int(pltpu.get_tpu_info().vmem_capacity_bytes)
    except Exception:  # query unavailable (interpret mode, older jax, ...)
        cap = 64 * 1024 * 1024
    return max(32 * 1024 * 1024, min(cap * 3 // 4, 112 * 1024 * 1024))


def _l2_normalize(v, eps=1e-12):
    # F.normalize(p=2, dim=-1): v / max(||v||, eps) == v * rsqrt(max(sumsq, eps^2))
    sumsq = jnp.sum(v * v, axis=-1, keepdims=True)
    return v * jax.lax.rsqrt(jnp.maximum(sumsq, eps * eps))


def _pick_divisor_tile(total, target=512):
    """Largest multiple of 128 that divides `total` and is <= target."""
    best = 128
    t = 128
    while t <= min(total, target):
        if total % t == 0:
            best = t
        t += 128
    return best


def _pick_row_tile(m, d_in, dp, itemsize, vmem_budget):
    """Rows per grid step for the linear kernels, sized against VMEM."""
    fixed = 2 * d_in * dp * itemsize + 2 * dp * 4        # weight (x2 bufs) + bias
    per_row = 2 * d_in * itemsize + 2 * dp * 4           # x tile (x2) + f32 out (x2)
    avail = max(vmem_budget - fixed, per_row * 8)
    tm = int(min(avail // per_row, 1024, _round_up(m, 8)))
    step = 16 if itemsize < 4 else 8                     # bf16 packs 2 rows/sublane
    tm = max(step, (tm // step) * step)
    if tm >= 256:                                        # MXU-friendly granularity
        tm = (tm // 128) * 128
    return tm


def _pick_reduce_tiles(b, l, d_in, dp, itemsize, vmem_budget):
    """(sequences per step, rows per sequence per step) for the reduce kernel."""
    tl = min(_round_up(l, 8), 512)
    bg = int(min(b, max(1, 256 // tl), 32))              # fill the MXU with bg*tl rows

    def vmem_use(bg_, tl_):
        fixed = 2 * d_in * dp * itemsize + 2 * dp * 4    # weight (x2) + bias
        return (fixed
                + 2 * bg_ * tl_ * d_in * itemsize        # x block (x2)
                + 2 * bg_ * dp * 4                       # out block (x2)
                + 2 * bg_ * tl_ * dp * 4)                # y + masked copy

    while bg > 1 and vmem_use(bg, tl) > vmem_budget:
        bg -= 1
    while tl > 8 and vmem_use(bg, tl) > vmem_budget:
        tl = max(8, _round_up(tl // 2, 8))
    return bg, tl


# ------------------- Kernel A: linear (+ optional L2 norm) ------------------

def _linear_resident_kernel(x_ref, w_ref, b_ref, o_ref, *, normalize):
    # Full (D, Dp) weight is VMEM-resident (constant index_map); one matmul
    # per row tile, bias + optional per-row L2 norm fused.
    y = jnp.dot(x_ref[...], w_ref[...], preferred_element_type=jnp.float32)
    y = y + b_ref[...].astype(jnp.float32)
    if normalize:
        y = _l2_normalize(y)
    o_ref[...] = y.astype(o_ref.dtype)


def _linear_ktiled_kernel(x_ref, w_ref, b_ref, o_ref, *, normalize):
    # Large-D fallback: K-tiled, accumulating directly into the f32 output
    # block (its block index is constant across k, so it stays resident).
    k = pl.program_id(1)

    @pl.when(k == 0)
    def _():
        o_ref[...] = jnp.zeros_like(o_ref)

    o_ref[...] += jnp.dot(x_ref[...], w_ref[...],
                          preferred_element_type=jnp.float32)

    @pl.when(k == pl.num_programs(1) - 1)
    def _():
        y = o_ref[...] + b_ref[...].astype(jnp.float32)
        if normalize:
            y = _l2_normalize(y)
        o_ref[...] = y


def fused_linear(x2d, w_t, bias, *, normalize, ktiled, tm=None, tk=None,
                 vmem_limit=None):
    """y[M, Dp] = x2d @ w_t + bias, optionally per-row L2 normalised."""
    M, D_in = x2d.shape
    K_w, Dp = w_t.shape
    assert bias.shape == (1, Dp)
    itemsize = jnp.dtype(x2d.dtype).itemsize
    if vmem_limit is None:
        vmem_limit = _vmem_limit_bytes()

    if not ktiled:
        # -------- weight-resident fast path (no K axis) --------
        assert K_w == D_in
        if tm is None:
            tm = _pick_row_tile(M, D_in, Dp, itemsize, vmem_limit)
        n_i = pl.cdiv(M, tm)
        cost = pl.CostEstimate(
            flops=2 * M * D_in * Dp,
            transcendentals=M if normalize else 0,
            bytes_accessed=(M * D_in * itemsize + D_in * Dp * itemsize
                            + Dp * 4 + M * Dp * 4))
        return pl.pallas_call(
            functools.partial(_linear_resident_kernel, normalize=normalize),
            out_shape=jax.ShapeDtypeStruct((M, Dp), jnp.float32),
            grid_spec=pltpu.PrefetchScalarGridSpec(
                num_scalar_prefetch=0,
                grid=(n_i,),
                in_specs=[
                    pl.BlockSpec((tm, D_in), lambda i: (i, 0)),   # x row tile
                    pl.BlockSpec((K_w, Dp), lambda i: (0, 0)),    # weight resident
                    pl.BlockSpec((1, Dp), lambda i: (0, 0)),      # bias resident
                ],
                out_specs=pl.BlockSpec((tm, Dp), lambda i: (i, 0)),
            ),
            compiler_params=pltpu.CompilerParams(
                dimension_semantics=("parallel",),
                vmem_limit_bytes=vmem_limit),
            cost_estimate=cost,
        )(x2d, w_t, bias)

    # -------- K-tiled fallback (weight too large to keep resident) --------
    assert K_w == Dp and D_in == Dp
    if tk is None:
        tk = _pick_divisor_tile(Dp)
    if tm is None:
        tm = _pick_row_tile(M, tk, Dp, itemsize, vmem_limit)
    n_i = pl.cdiv(M, tm)
    cost = pl.CostEstimate(
        flops=2 * M * Dp * Dp,
        transcendentals=M if normalize else 0,
        bytes_accessed=(M * Dp * itemsize + n_i * Dp * Dp * itemsize
                        + Dp * 4 + M * Dp * 4))
    return pl.pallas_call(
        functools.partial(_linear_ktiled_kernel, normalize=normalize),
        out_shape=jax.ShapeDtypeStruct((M, Dp), jnp.float32),
        grid_spec=pltpu.PrefetchScalarGridSpec(
            num_scalar_prefetch=0,
            grid=(n_i, Dp // tk),
            in_specs=[
                pl.BlockSpec((tm, tk), lambda i, k: (i, k)),
                pl.BlockSpec((tk, Dp), lambda i, k: (k, 0)),
                pl.BlockSpec((1, Dp), lambda i, k: (0, 0)),
            ],
            out_specs=pl.BlockSpec((tm, Dp), lambda i, k: (i, 0)),
        ),
        compiler_params=pltpu.CompilerParams(
            dimension_semantics=("parallel", "arbitrary"),
            vmem_limit_bytes=vmem_limit),
        cost_estimate=cost,
    )(x2d, w_t, bias)


# ---- Kernel B: fused linear + optional L2 + masked per-sequence reduce -----

def _linear_reduce_kernel(lens_ref, x_ref, w_ref, b_ref, o_ref, *,
                          normalize, reduce_opt, bg, tl):
    bi = pl.program_id(0)
    lt = pl.program_id(1)
    n_l = pl.num_programs(1)

    @pl.when(lt == 0)
    def _():
        o_ref[...] = jnp.zeros_like(o_ref)

    # Concatenate bg whole sequence tiles into one (bg*tl, D) matmul so the
    # resident weight is shared and the MXU stays filled for short sequences.
    xs = [x_ref[j] for j in range(bg)]                               # (tl, Din) each
    x2 = jnp.concatenate(xs, axis=0) if bg > 1 else xs[0]            # (bg*tl, Din)
    y = jnp.dot(x2, w_ref[...], preferred_element_type=jnp.float32)  # (bg*tl, Dp)
    y = y + b_ref[...].astype(jnp.float32)
    if normalize:
        y = _l2_normalize(y)

    # Per-sequence masked sum (mask also covers rows past L / batch overhang).
    row = lt * tl + jax.lax.broadcasted_iota(jnp.int32, (tl, 1), 0)  # (tl, 1)
    parts = []
    for j in range(bg):                                              # bg small & static
        l_j = lens_ref[bi * bg + j]
        yj = jnp.where(row < l_j, y[j * tl:(j + 1) * tl], 0.0)
        parts.append(jnp.sum(yj, axis=0, keepdims=True))             # (1, Dp)
    acc = jnp.concatenate(parts, axis=0) if bg > 1 else parts[0]     # (bg, Dp)
    o_ref[...] += acc[:, None, :]

    if reduce_opt != 'sum':
        @pl.when(lt == n_l - 1)
        def _():
            out = o_ref[...][:, 0, :]                                # (bg, Dp) sums
            # Precondition (same as the PyTorch module): every length >= 1.
            invs = [(1.0 / lens_ref[bi * bg + j].astype(jnp.float32)).reshape(1, 1)
                    for j in range(bg)]
            inv = jnp.concatenate(invs, axis=0) if bg > 1 else invs[0]
            out = out * inv                                          # mean
            if reduce_opt == 'reduce_norm':
                out = _l2_normalize(out)
            o_ref[...] = out[:, None, :]


def fused_linear_reduce(x3, lens_i32, w_t, bias, *, normalize, reduce_opt,
                        bg, tl, vmem_limit=None):
    """Per-sequence (linear -> optional L2 -> masked sum/mean/reduce_norm)."""
    B, L, D_in = x3.shape
    K_w, Dp = w_t.shape
    assert K_w == D_in and bias.shape == (1, Dp)
    itemsize = jnp.dtype(x3.dtype).itemsize
    if vmem_limit is None:
        vmem_limit = _vmem_limit_bytes()

    cost = pl.CostEstimate(
        flops=2 * B * L * D_in * Dp,
        transcendentals=B * L if (normalize or reduce_opt == 'reduce_norm') else 0,
        bytes_accessed=(B * L * D_in * itemsize + D_in * Dp * itemsize
                        + Dp * 4 + B * Dp * 4))

    out = pl.pallas_call(
        functools.partial(_linear_reduce_kernel, normalize=normalize,
                          reduce_opt=reduce_opt, bg=bg, tl=tl),
        out_shape=jax.ShapeDtypeStruct((B, 1, Dp), jnp.float32),
        grid_spec=pltpu.PrefetchScalarGridSpec(
            num_scalar_prefetch=1,                                   # lens -> SMEM
            grid=(pl.cdiv(B, bg), pl.cdiv(L, tl)),
            in_specs=[
                pl.BlockSpec((bg, tl, D_in), lambda bi, lt, lens: (bi, lt, 0)),
                pl.BlockSpec((K_w, Dp), lambda bi, lt, lens: (0, 0)),  # resident
                pl.BlockSpec((1, Dp), lambda bi, lt, lens: (0, 0)),    # resident
            ],
            out_specs=pl.BlockSpec((bg, 1, Dp), lambda bi, lt, lens: (bi, 0, 0)),
        ),
        compiler_params=pltpu.CompilerParams(
            dimension_semantics=("parallel", "arbitrary"),
            vmem_limit_bytes=vmem_limit),
        cost_estimate=cost,
    )(lens_i32, x3, w_t, bias)
    return out[:, 0, :]


# ------------------------------ Module wrapper -------------------------------

class FCEmbeder:
    """JAX/Pallas port of the PyTorch FCEmbeder (forward only)."""

    def __init__(self, indim, norm_opt='none', reduce_opt='none',
                 compute_dtype=jnp.float32,
                 weight_resident_max_bytes=16 * 1024 * 1024):
        assert norm_opt in ['norm', 'none']
        assert reduce_opt in ['sum', 'mean', 'reduce_norm', 'none']
        self.indim = indim
        self.norm_opt = norm_opt
        self.reduce_opt = reduce_opt
        # float32 matches PyTorch numerics exactly; bfloat16 operands (with
        # f32 accumulation) roughly double MXU throughput on v6e/v7x.
        self.compute_dtype = jnp.dtype(compute_dtype)
        self.weight_resident_max_bytes = weight_resident_max_bytes
        self._vmem_limit = _vmem_limit_bytes()
        self._param_cache = {}
        # nn.init.eye_ / nn.init.constant_(0)
        self._weight = jnp.eye(indim, dtype=jnp.float32)       # (out, in)
        self._bias = jnp.zeros((indim,), dtype=jnp.float32)

    # ---- parameters (assignment invalidates the padded/cast cache) ----------
    @property
    def weight(self):
        return self._weight

    @weight.setter
    def weight(self, value):
        self._weight = jnp.asarray(value, jnp.float32)
        self._param_cache = {}

    @property
    def bias(self):
        return self._bias

    @bias.setter
    def bias(self, value):
        self._bias = jnp.asarray(value, jnp.float32)
        self._param_cache = {}

    # ---- cached padded / transposed / cast parameters -----------------------
    def _use_resident(self):
        D = self.indim
        Dp = _round_up(D, 128)
        wbytes = D * Dp * self.compute_dtype.itemsize
        return wbytes <= min(self.weight_resident_max_bytes, self._vmem_limit // 3)

    def _padded_params(self, resident):
        key = ('resident' if resident else 'ktiled', self.compute_dtype.name)
        cached = self._param_cache.get(key)
        if cached is not None:
            return cached
        D = self.indim
        Dp = _round_up(D, 128)                       # lane-dense output columns
        k_dim = D if resident else Dp
        w_t = jnp.zeros((k_dim, Dp), jnp.float32)
        w_t = w_t.at[:D, :D].set(self._weight.T)     # transpose + pad once
        w_t = w_t.astype(self.compute_dtype)
        b = jnp.zeros((1, Dp), jnp.float32)
        b = b.at[0, :D].set(self._bias)
        cached = (w_t, b, Dp)
        self._param_cache[key] = cached
        return cached

    # ---- forward -------------------------------------------------------------
    def __call__(self, x, lens):
        # x: (B, L, D); lens: per-sequence valid lengths (static python ints).
        B, L, D = x.shape
        assert D == self.indim
        lens_int = [int(l) for l in lens]
        normalize = self.norm_opt == 'norm'
        resident = self._use_resident()
        w_t, bias, Dp = self._padded_params(resident)

        x = jnp.asarray(x)
        if x.dtype != self.compute_dtype:
            x = x.astype(self.compute_dtype)

        if self.reduce_opt != 'none' and resident:
            # Fused: linear -> optional L2 -> masked per-sequence sum/mean/norm,
            # with several sequences batched per grid step.
            bg, tl = _pick_reduce_tiles(B, L, D, Dp,
                                        self.compute_dtype.itemsize,
                                        self._vmem_limit)
            Bp = pl.cdiv(B, bg) * bg
            lens_dev = jnp.ones((Bp,), jnp.int32).at[:B].set(
                jnp.asarray(lens_int, jnp.int32))
            out = fused_linear_reduce(x, lens_dev, w_t, bias,
                                      normalize=normalize,
                                      reduce_opt=self.reduce_opt,
                                      bg=bg, tl=tl,
                                      vmem_limit=self._vmem_limit)
            seq_embed = out[:, :D]                               # (B, D)
        else:
            x2d = x.reshape(B * L, D)
            if not resident and Dp != D:
                x2d = jnp.pad(x2d, ((0, 0), (0, Dp - D)))        # K tiling needs pad
            y = fused_linear(x2d, w_t, bias, normalize=normalize,
                             ktiled=not resident,
                             vmem_limit=self._vmem_limit)
            y = y.reshape(B, L, Dp)[:, :, :D]
            if self.reduce_opt == 'none':
                # Ragged output: host-side gather of the valid rows.
                # TODO(synk): under jit this retraces per distinct lens pattern.
                seq_embed = jnp.concatenate(
                    [y[b, :lens_int[b]] for b in range(B)], axis=0)
            else:
                # TODO(synk): K-tiled (very large indim) reduce path finishes in
                # plain JAX; a dedicated Pallas segment-reduce would avoid the
                # (B, L, D) HBM round-trip.
                mask = (jnp.arange(L)[None, :]
                        < jnp.asarray(lens_int, jnp.int32)[:, None])
                s = jnp.where(mask[:, :, None], y, 0.0).sum(axis=1)   # (B, D)
                lens_f = jnp.asarray(lens_int, jnp.float32)[:, None]
                if self.reduce_opt == 'sum':
                    seq_embed = s
                elif self.reduce_opt == 'mean':
                    seq_embed = s / lens_f
                else:                                                 # reduce_norm
                    seq_embed = _l2_normalize(s / lens_f)

        # torch.long is int64; JAX default int is int32 unless x64 is enabled.
        lens_out = jnp.asarray(lens_int, dtype=jnp.int32)
        return seq_embed, lens_out


# ------------------------------ pure-JAX reference ---------------------------

def _ref_forward(x, lens, weight, bias, norm_opt, reduce_opt):
    embed = x @ weight.T + bias
    outs = []
    for b, l in enumerate(lens):
        out = embed[b, :int(l)]
        if norm_opt == 'norm':
            out = _l2_normalize(out)
        if reduce_opt == 'reduce_norm':
            out = _l2_normalize(out.mean(0, keepdims=True))
        elif reduce_opt == 'sum':
            out = out.sum(0, keepdims=True)
        elif reduce_opt == 'mean':
            out = out.mean(0, keepdims=True)
        outs.append(out)
    return jnp.concatenate(outs, 0)


# ----------------------------------- main ------------------------------------

if __name__ == "__main__":
    B, L, D = 2, 8, 32
    key = jax.random.PRNGKey(0)
    kx, kw, kb = jax.random.split(key, 3)
    x = jax.random.normal(kx, (B, L, D), dtype=jnp.float32)
    lens = [5, 8]

    # 1) Default init (eye weight, zero bias), 'none'/'none':
    #    output must equal the concatenation of x[b, :lens[b]].
    model = FCEmbeder(indim=D, norm_opt='none', reduce_opt='none')
    seq_embed, out_lens = model(x, lens)
    jax.block_until_ready(seq_embed)
    jax.block_until_ready(out_lens)
    expected = jnp.concatenate([x[b, :lens[b]] for b in range(B)], axis=0)
    assert seq_embed.shape == (sum(lens), D)
    assert jnp.allclose(seq_embed, expected, atol=1e-5, rtol=1e-5)
    assert list(map(int, out_lens)) == lens

    # 2) Random weight/bias, every norm/reduce combination, vs pure-JAX ref.
    w = 0.1 * jax.random.normal(kw, (D, D), dtype=jnp.float32)
    b = 0.1 * jax.random.normal(kb, (D,), dtype=jnp.float32)
    for norm_opt in ['none', 'norm']:
        for reduce_opt in ['none', 'sum', 'mean', 'reduce_norm']:
            m = FCEmbeder(indim=D, norm_opt=norm_opt, reduce_opt=reduce_opt)
            m.weight, m.bias = w, b
            got, _ = m(x, lens)
            jax.block_until_ready(got)
            want = _ref_forward(x, lens, w, b, norm_opt, reduce_opt)
            assert got.shape == want.shape, (norm_opt, reduce_opt, got.shape)
            assert jnp.allclose(got, want, atol=1e-4, rtol=1e-4), \
                (norm_opt, reduce_opt)

    # 3) K-tiled fallback kernel (used only for very large indim) exercised
    #    directly with two K steps.
    D2 = 256
    kx2, kw2, kb2 = jax.random.split(jax.random.PRNGKey(1), 3)
    x2 = jax.random.normal(kx2, (16, D2), dtype=jnp.float32)
    w2 = 0.1 * jax.random.normal(kw2, (D2, D2), dtype=jnp.float32)
    b2 = 0.1 * jax.random.normal(kb2, (D2,), dtype=jnp.float32)
    y_kt = fused_linear(x2, w2.T, b2.reshape(1, D2), normalize=True,
                        ktiled=True, tk=128)
    jax.block_until_ready(y_kt)
    y_ref = _l2_normalize(x2 @ w2.T + b2)
    assert jnp.allclose(y_kt, y_ref, atol=1e-3, rtol=1e-3)

    print("KERNEL_OK")
</pallas_src>

<mosaic_0001>
module attributes {stable_mosaic.version = 11 : i64} {
  func.func @_linear_resident_kernel(%arg0: i32, %arg1: memref<16x32xf32, #tpu.memory_space<vmem>>, %arg2: memref<32x128xf32, #tpu.memory_space<vmem>>, %arg3: memref<1x128xf32, #tpu.memory_space<vmem>>, %arg4: memref<16x128xf32, #tpu.memory_space<vmem>>) attributes {dimension_semantics = [#tpu.dimension_semantics<parallel>], iteration_bounds = array<i64: 1>, scalar_prefetch = 0 : i64, scratch_operands = 0 : i64, tpu.core_type = #tpu.core_type<tc>, window_params = [{transform_indices = @transform_0, window_bounds = array<i64: 16, 32>}, {pipeline_mode = #tpu.pipeline_mode<synchronous>, transform_indices = @transform_1, window_bounds = array<i64: 32, 128>}, {pipeline_mode = #tpu.pipeline_mode<synchronous>, transform_indices = @transform_2, window_bounds = array<i64: 1, 128>}, {transform_indices = @transform_3, window_bounds = array<i64: 16, 128>}]} {
    %c0 = arith.constant 0 : index
    %c0_0 = arith.constant 0 : index
    %0 = vector.load %arg1[%c0, %c0_0] : memref<16x32xf32, #tpu.memory_space<vmem>>, vector<16x32xf32>
    %c0_1 = arith.constant 0 : index
    %c0_2 = arith.constant 0 : index
    %1 = vector.load %arg2[%c0_1, %c0_2] : memref<32x128xf32, #tpu.memory_space<vmem>>, vector<32x128xf32>
    %cst = arith.constant dense<0.000000e+00> : vector<16x128xf32>
    %2 = tpu.matmul %0, %1, %cst {dimension_numbers = #tpu.dot_dimension_numbers<[1], [0], [0], [1], [0, 0, 1, 1], [], []>} : vector<16x32xf32>, vector<32x128xf32>, vector<16x128xf32> -> vector<16x128xf32>
    %c0_3 = arith.constant 0 : index
    %c0_4 = arith.constant 0 : index
    %3 = vector.load %arg3[%c0_3, %c0_4] : memref<1x128xf32, #tpu.memory_space<vmem>>, vector<1x128xf32>
    %4 = vector.broadcast %3 : vector<1x128xf32> to vector<16x128xf32>
    %5 = arith.addf %2, %4 : vector<16x128xf32>
    %c0_5 = arith.constant 0 : index
    %c0_6 = arith.constant 0 : index
    %6 = vector.load %arg4[%c0_5, %c0_6] : memref<16x128xf32, #tpu.memory_space<vmem>>, vector<16x128xf32>
    tpu.vector_store %arg4[%c0_5, %c0_6], %5 {strides = array<i32>} : memref<16x128xf32, #tpu.memory_space<vmem>>, vector<16x128xf32>,
    return
  }
  func.func @transform_0(%arg0: i32) -> (i32, i32) {
    %c0_i32 = arith.constant 0 : i32
    %c0_i32_0 = arith.constant 0 : i32
    return %arg0, %c0_i32 : i32, i32
  }
  func.func @transform_1(%arg0: i32) -> (i32, i32) {
    %c0_i32 = arith.constant 0 : i32
    %c0_i32_0 = arith.constant 0 : i32
    %c0_i32_1 = arith.constant 0 : i32
    return %c0_i32, %c0_i32_0 : i32, i32
  }
  func.func @transform_2(%arg0: i32) -> (i32, i32) {
    %c0_i32 = arith.constant 0 : i32
    %c0_i32_0 = arith.constant 0 : i32
    %c0_i32_1 = arith.constant 0 : i32
    return %c0_i32, %c0_i32_0 : i32, i32
  }
  func.func @transform_3(%arg0: i32) -> (i32, i32) {
    %c0_i32 = arith.constant 0 : i32
    %c0_i32_0 = arith.constant 0 : i32
    return %arg0, %c0_i32 : i32, i32
  }
}

</mosaic_0001>

<llo_original>
// kernel: tpu_custom_call.1
$region0: #{tpu_custom_call.1}
  #allocation0 [shape = 'u32[]', space=smem, size = 0x4, offset = 0x4, fixed_abs, tag = 'smem constant byte address 0x4 - core index']
  #allocation1 [shape = 'u32[72,128]{1,0:T(1,128)}', space=vmem, size = 0x9000, scoped, tag = 'internal scratch']
  %s0 = inlined_call_operand.hbm [shape: f32[16,32], index: 0, kind: input, shape index: {}]
  %s1 = inlined_call_operand.hbm [shape: f32[32,128], index: 1, kind: input, shape index: {}]
  %s2 = inlined_call_operand.vmem [shape: f32[1,128], index: 2, kind: input, shape index: {}]
  %s3 = inlined_call_operand.hbm [shape: f32[16,128], index: 3, kind: output, shape index: {}]
  %s4 = sld [smem:[#allocation0]]
  $region30: #{tpu_custom_call.1} parent=0
    _
  %s6 = ssub.s32 1, %s4
  %s7 = scalar_select 0, %s6, %s4
  $region1: #{tpu_custom_call.1} parent=0
    #allocation2 [shape = 'u8[8192]{0}', space=vmem, size = 0x2000, scoped, tag = 'input window, operand 0, single buffered']
    #allocation3 [shape = 's32[1]{0}', space=sflag, size = 0x4, scoped, tag = 'scoped memory for tpu_custom_call.1']
    #allocation4 [shape = 's32[1]{0}', space=sflag, size = 0x4, scoped, tag = 'scoped memory for tpu_custom_call.1']
    #allocation5 [shape = 'u8[16384]{0}', space=vmem, size = 0x4000, scoped, tag = 'input window, operand 1, single buffered']
    #allocation6 [shape = 's32[1]{0}', space=sflag, size = 0x4, scoped, tag = 'scoped memory for tpu_custom_call.1']
    #allocation7 [shape = 'u8[8192]{0}', space=vmem, size = 0x2000, scoped, tag = 'output window, operand 0, single buffered']
    %8 = vsyncpa [#allocation3], 0
    %9 = vsyncpa [#allocation6], 0
    %10 = vsyncpa [#allocation4], 0
    // Predicated region
    $region2: #{tpu_custom_call.1} parent=1 // pred_check
      _
    $region3: #{tpu_custom_call.1} parent=1 // pred_check_branch
      %12 = sbr.rel (0) target = $region5
    $region4: #{tpu_custom_call.1} parent=1 // pred_region
      %14 = vsyncadd [#allocation3], 0
      %s15 = sshll.u32 %s0, 4
      %s16 = int_to_ptr.hbm [resolvable:$true] %s15
      %s17 = sshll.u32 [#allocation2], 4
      %s18 = int_to_ptr.vmem [resolvable:$true] %s17
      %23 = dma.hbm_to_vmem [thread:$0]  %s16, 256, %s18, [#allocation3], 128, 128, 8
    $region5: #{tpu_custom_call.1} parent=1 // pred_fallthru
      _
    // Predicated region
    $region6: #{tpu_custom_call.1} parent=1 // pred_check
      _
    $region7: #{tpu_custom_call.1} parent=1 // pred_check_branch
      %25 = sbr.rel (0) target = $region9
    $region8: #{tpu_custom_call.1} parent=1 // pred_region
      %27 = vsyncadd [#allocation6], 0
      %s28 = sshll.u32 %s1, 4
      %s29 = int_to_ptr.hbm [resolvable:$true] %s28
      %s30 = sshll.u32 [#allocation5], 4
      %s31 = int_to_ptr.vmem [resolvable:$true] %s30
      %36 = dma.hbm_to_vmem [thread:$0]  %s29, 512, %s31, [#allocation6], 128, 128, 8
    $region9: #{tpu_custom_call.1} parent=1 // pred_fallthru
      _
    // Predicated region
    $region10: #{tpu_custom_call.1} parent=1 // pred_check
      _
    $region11: #{tpu_custom_call.1} parent=1 // pred_check_branch
      %38 = sbr.rel (0) target = $region13
    $region12: #{tpu_custom_call.1} parent=1 // pred_region
      _
    $region13: #{tpu_custom_call.1} parent=1 // pred_fallthru
      _
    // Predicated region
    $region14: #{tpu_custom_call.1} parent=1 // pred_check
      _
    $region15: #{tpu_custom_call.1} parent=1 // pred_check_branch
      %40 = sbr.rel (0) target = $region17
    $region16: #{tpu_custom_call.1} parent=1 // pred_region
      %42 = dma.done [#allocation3], 256
    $region17: #{tpu_custom_call.1} parent=1 // pred_fallthru
      _
    // Predicated region
    $region18: #{tpu_custom_call.1} parent=1 // pred_check
      _
    $region19: #{tpu_custom_call.1} parent=1 // pred_check_branch
      %44 = sbr.rel (0) target = $region21
    $region20: #{tpu_custom_call.1} parent=1 // pred_region
      %46 = dma.done [#allocation6], 512
    $region21: #{tpu_custom_call.1} parent=1 // pred_fallthru
      _
    %v47 = vld [vmem:[#allocation2] sm:$0xff]
    %v48 = vld [vmem:[#allocation2 + $0x8] sm:$0xff]
    %v49 = vld [vmem:[#allocation5] sm:$0xff]
    %v50 = vld [vmem:[#allocation5 + $0x8] sm:$0xff]
    %v51 = vld [vmem:[#allocation5 + $0x10] sm:$0xff]
    %v52 = vld [vmem:[#allocation5 + $0x18] sm:$0xff]
    %v53 = vld [vmem:[%s2] sm:$0x1]
    %v55 = vperm.slane %v53, 0
    %vm57 = vcmask 261120
    %v59 = vsel %vm57, %v47, 0
    %v62 = vsel %vm57, %v48, 0
    %64 = vmatpush.msra.mxu0 0.0
    %65 = vmatpush.msra.mxu0 0.0
    %66 = vmatpush.msra.mxu0 0.0
    %67 = vmatpush.msra.mxu0 0.0
    %68 = vmatpush.msra.mxu0 0.0
    %69 = vmatpush.msra.mxu0 0.0
    %70 = vmatpush.msra.mxu0 0.0
    %71 = vmatpush.msra.mxu0 0.0
    %72 = vmatpush.msra.mxu0 0.0
    %73 = vmatpush.msra.mxu0 0.0
    %74 = vmatpush.msra.mxu0 0.0
    %75 = vmatpush.msra.mxu0 0.0
    %76 = vmatpush.msra.mxu0 %v52
    %77 = vmatpush.msra.mxu0 %v51
    %78 = vmatpush.msra.mxu0 %v50
    %79 = vmatpush.msra.mxu0 %v49
    %80 = vmatmul.f32.gmra.mxu0 %v59
    %v81 = vpop.f32.mrf.mxu0
    %v82 = vadd.f32 %v55, %v81
    %83 = vmatmul.f32.gmra.mxu0 %v62
    %v84 = vpop.f32.mrf.mxu0
    %v85 = vadd.f32 %v55, %v84
    %86 = vdwg.mxu0
    %87 = vst [vmem:[#allocation7] sm:$0xff] %v82
    %88 = vst [vmem:[#allocation7 + $0x8] sm:$0xff] %v85
    // Predicated region
    $region22: #{tpu_custom_call.1} parent=1 // pred_check
      _
    $region23: #{tpu_custom_call.1} parent=1 // pred_check_branch
      %90 = sbr.rel (0) target = $region25
    $region24: #{tpu_custom_call.1} parent=1 // pred_region
      %92 = vsyncadd [#allocation4], 0
      %s93 = sshll.u32 [#allocation7], 4
      %s94 = int_to_ptr.vmem [resolvable:$true] %s93
      %s95 = sshll.u32 %s3, 4
      %s96 = int_to_ptr.hbm [resolvable:$true] %s95
      %101 = dma.vmem_to_hbm [thread:$0]  %s94, 256, %s96, [#allocation4], 128, 128, 8
    $region25: #{tpu_custom_call.1} parent=1 // pred_fallthru
      _
    // Predicated region
    $region26: #{tpu_custom_call.1} parent=1 // pred_check
      _
    $region27: #{tpu_custom_call.1} parent=1 // pred_check_branch
      %103 = sbr.rel (0) target = $region29
    $region28: #{tpu_custom_call.1} parent=1 // pred_region
      %105 = dma.done [#allocation4], 256
    $region29: #{tpu_custom_call.1} parent=1 // pred_fallthru
      _
    %106 = vsyncpa [#allocation3], 1
    %107 = vsyncpa [#allocation6], 1
    %108 = vsyncpa [#allocation4], 1

</llo_original>
